<compile_context>
chip_gen: v6e
topology: v6e:2x2x1
jax: 0.10.0
libtpu: 0.0.40
codegen_flags: <defaults>
</compile_context>

<pallas_src>
import functools

import jax
import jax.numpy as jnp
from jax.experimental import pallas as pl
from jax.experimental.pallas import tpu as pltpu


# ----------------------------------------------------------------------------
# Main (single-pass, batch-blocked) kernel
# ----------------------------------------------------------------------------
def se_block_kernel(x_ref, w1_ref, w2_ref, o_ref, *, inv_hw):
    # x_ref/o_ref: (B_blk, C, HW)   w1_ref: (C, Cr)   w2_ref: (Cr, C)
    # Squeeze: fused cast+reduce over the lane axis (no whole-tile f32 copy).
    y = jnp.sum(x_ref[...], axis=2, dtype=jnp.float32) * inv_hw           # (B_blk, C)

    # Excitation: Linear -> ReLU -> Linear -> Sigmoid (f32 on the MXU/EUP).
    # MXU is heavily underfilled here, but compute is microscopic and fully
    # hidden behind the HBM stream — do not "optimize" these matmuls.
    h = jnp.maximum(jnp.dot(y, w1_ref[...], preferred_element_type=jnp.float32), 0.0)
    s = jax.nn.sigmoid(jnp.dot(h, w2_ref[...], preferred_element_type=jnp.float32))

    # Scale. Gate is applied in the input dtype to avoid a full-precision copy
    # of the tile (for f32 inputs this is exact; for bf16 the gate is
    # quantized to bf16, matching common inference practice).
    o_ref[...] = (x_ref[...] * s[:, :, None].astype(x_ref.dtype)).astype(o_ref.dtype)


# ----------------------------------------------------------------------------
# Spatial-split fallback kernels (one batch slab does not fit the VMEM budget)
# ----------------------------------------------------------------------------
def _pool_gate_kernel(x_ref, w1_ref, w2_ref, s_ref, acc_ref, *, inv_hw, hw_tile, total_hw):
    # grid = (B, grid_hw); x_ref: (1, C, hw_tile); s_ref: (1, C, 1); acc: (1, C) f32
    hw = pl.program_id(1)

    @pl.when(hw == 0)
    def _():
        acc_ref[...] = jnp.zeros_like(acc_ref)

    # Mask the (possibly partial) last HW tile: out-of-bounds lanes are
    # unspecified, so zero them before accumulating.
    lane = jax.lax.broadcasted_iota(jnp.int32, (1, 1, hw_tile), 2)
    valid = (hw * hw_tile + lane) < total_hw
    acc_ref[...] += jnp.sum(jnp.where(valid, x_ref[...], 0), axis=2, dtype=jnp.float32)

    @pl.when(hw == pl.num_programs(1) - 1)
    def _():
        y = acc_ref[...] * inv_hw                                         # (1, C)
        h = jnp.maximum(jnp.dot(y, w1_ref[...], preferred_element_type=jnp.float32), 0.0)
        s = jax.nn.sigmoid(jnp.dot(h, w2_ref[...], preferred_element_type=jnp.float32))
        s_ref[...] = s[:, :, None]                                        # (1, C, 1)


def _scale_kernel(s_ref, x_ref, o_ref):
    # s_ref: (1, C, 1) f32 gate ; x_ref/o_ref: (1, C, hw_tile)
    o_ref[...] = (x_ref[...] * s_ref[...].astype(x_ref.dtype)).astype(o_ref.dtype)


# ----------------------------------------------------------------------------
# Tiling helpers
# ----------------------------------------------------------------------------
def _tpu_vmem_capacity_bytes():
    try:
        info = pltpu.get_tpu_info()
        cap = getattr(info, "vmem_capacity_bytes", None)
        if cap:
            return int(cap)
    except Exception:
        pass
    return 64 << 20  # assume the smaller (v7x-like) VMEM if unknown


def _tiling_params():
    """Generation-gated block target/budget and VMEM limit cap."""
    cap = _tpu_vmem_capacity_bytes()
    if cap >= (96 << 20):
        # v5e / v6e: 128 MiB VMEM, lower HBM BW -> bigger blocks, higher limit.
        return dict(target_bytes=8 << 20, budget_bytes=16 << 20,
                    vmem_cap=100 << 20, min_steps=2)
    # v7x (64 MiB VMEM, 3.2 TB/s HBM) or unknown: conservative cap, 2 TCs
    # prefer >= 4 grid steps so each core still gets pipelined iterations.
    return dict(target_bytes=6 << 20, budget_bytes=8 << 20,
                vmem_cap=48 << 20, min_steps=4)


def _pick_batch_block(B, per_batch_bytes, *, target_bytes, budget_bytes, min_steps):
    """Pick a batch block size (divisor of B).

    Priority: (1) fit the budget, (2) reach the DMA-amortization target,
    (3) among target-reaching choices maximize grid steps, (4) if nothing can
    reach the target (small problem) prefer >= min_steps grid steps.
    Returns None if a single batch element already exceeds the budget
    (caller must use the spatial-split path).
    """
    divisors = [d for d in range(1, B + 1) if B % d == 0]
    fits = [d for d in divisors if d * per_batch_bytes <= budget_bytes]
    if not fits:
        return None
    reaching = [d for d in fits if d * per_batch_bytes >= target_bytes]
    if reaching:
        return min(reaching)
    stepped = [d for d in fits if B // d >= min_steps]
    return max(stepped) if stepped else max(fits)


# ----------------------------------------------------------------------------
# Wrappers
# ----------------------------------------------------------------------------
def _se_block_spatial_split(x, w1, w2, *, HW, budget_bytes, vmem_cap, weight_bytes):
    """Two-pass path for feature maps too large for one batch slab in VMEM."""
    B, C, _ = x.shape
    Cr = w1.shape[1]
    itemsize = jnp.dtype(x.dtype).itemsize

    hw_tile = max(128, (budget_bytes // (C * itemsize)) // 128 * 128)
    hw_tile = min(hw_tile, pl.cdiv(HW, 128) * 128)
    grid_hw = pl.cdiv(HW, hw_tile)

    block_bytes = C * hw_tile * itemsize
    vmem_limit = int(min(max(4 * block_bytes + 2 * weight_bytes + (4 << 20), 16 << 20),
                         vmem_cap))

    # Pass 1: pooled mean -> FC -> sigmoid gate.  Gate shape (B, C, 1).
    pool_kernel = functools.partial(_pool_gate_kernel, inv_hw=1.0 / HW,
                                    hw_tile=hw_tile, total_hw=HW)
    s = pl.pallas_call(
        pool_kernel,
        out_shape=jax.ShapeDtypeStruct((B, C, 1), jnp.float32),
        grid_spec=pltpu.PrefetchScalarGridSpec(
            num_scalar_prefetch=0,
            grid=(B, grid_hw),
            in_specs=[
                pl.BlockSpec((1, C, hw_tile), lambda b, h: (b, 0, h)),
                pl.BlockSpec((C, Cr), lambda b, h: (0, 0)),
                pl.BlockSpec((Cr, C), lambda b, h: (0, 0)),
            ],
            out_specs=pl.BlockSpec((1, C, 1), lambda b, h: (b, 0, 0)),
            scratch_shapes=[pltpu.VMEM((1, C), jnp.float32)],
        ),
        compiler_params=pltpu.CompilerParams(
            dimension_semantics=("parallel", "arbitrary"),
            vmem_limit_bytes=vmem_limit,
        ),
        cost_estimate=pl.CostEstimate(
            flops=B * C * HW + 4 * B * C * Cr,
            transcendentals=B * C,
            bytes_accessed=B * C * HW * itemsize + weight_bytes + B * C * 4,
        ),
    )(x, w1, w2)

    # Pass 2: rescale x (the extra read of x is the price of not fitting a
    # whole batch slab in VMEM).
    out = pl.pallas_call(
        _scale_kernel,
        out_shape=jax.ShapeDtypeStruct(x.shape, x.dtype),
        grid_spec=pltpu.PrefetchScalarGridSpec(
            num_scalar_prefetch=0,
            grid=(B, grid_hw),
            in_specs=[
                pl.BlockSpec((1, C, 1), lambda b, h: (b, 0, 0)),
                pl.BlockSpec((1, C, hw_tile), lambda b, h: (b, 0, h)),
            ],
            out_specs=pl.BlockSpec((1, C, hw_tile), lambda b, h: (b, 0, h)),
        ),
        compiler_params=pltpu.CompilerParams(
            dimension_semantics=("parallel", "parallel"),
            vmem_limit_bytes=vmem_limit,
        ),
        cost_estimate=pl.CostEstimate(
            flops=B * C * HW,
            transcendentals=0,
            bytes_accessed=2 * B * C * HW * itemsize + B * C * 4,
        ),
    )(s, x)

    return out


def se_block(x_nchw, w1, w2, *, block_budget_bytes=None):
    """x_nchw: (B, C, H, W). w1: (C, C//r). w2: (C//r, C). Returns (B, C, H, W)."""
    B, C, H, W = x_nchw.shape
    Cr = w1.shape[1]
    HW = H * W
    itemsize = jnp.dtype(x_nchw.dtype).itemsize

    params = _tiling_params()
    budget = int(block_budget_bytes) if block_budget_bytes is not None else params["budget_bytes"]
    target = min(params["target_bytes"], budget)
    vmem_cap = params["vmem_cap"]
    min_steps = params["min_steps"]

    # No padding of HW: a block dim equal to the full array dim is legal, and
    # the pad/slice pair would each cost a full extra HBM pass of x.
    x = x_nchw.reshape(B, C, HW)
    weight_bytes = (w1.size + w2.size) * jnp.dtype(w1.dtype).itemsize
    per_batch_bytes = C * HW * itemsize

    B_blk = _pick_batch_block(B, per_batch_bytes, target_bytes=target,
                              budget_bytes=budget, min_steps=min_steps)

    if B_blk is None:
        # One batch element's (C, HW) slab exceeds the per-block budget.
        out = _se_block_spatial_split(x, w1, w2, HW=HW, budget_bytes=budget,
                                      vmem_cap=vmem_cap, weight_bytes=weight_bytes)
        return out.reshape(B, C, H, W)

    # TODO(synk): for B < min_steps on v7x a second parallel grid axis (HW
    # split) would restore per-core pipelining; single-step grids still work.
    grid_b = B // B_blk
    block_bytes = B_blk * per_batch_bytes
    vmem_limit = int(min(max(4 * block_bytes + 2 * weight_bytes + (4 << 20), 16 << 20),
                         vmem_cap))

    cost = pl.CostEstimate(
        flops=2 * B * C * HW + 4 * B * C * Cr,     # pool adds + rescale muls + matmuls
        transcendentals=B * C,                     # sigmoid
        bytes_accessed=2 * B * C * HW * itemsize + weight_bytes,
    )

    kernel = functools.partial(se_block_kernel, inv_hw=1.0 / HW)

    out = pl.pallas_call(
        kernel,
        out_shape=jax.ShapeDtypeStruct((B, C, HW), x.dtype),
        grid_spec=pltpu.PrefetchScalarGridSpec(
            num_scalar_prefetch=0,
            grid=(grid_b,),
            in_specs=[
                pl.BlockSpec((B_blk, C, HW), lambda b: (b, 0, 0)),
                pl.BlockSpec((C, Cr), lambda b: (0, 0)),
                pl.BlockSpec((Cr, C), lambda b: (0, 0)),
            ],
            out_specs=pl.BlockSpec((B_blk, C, HW), lambda b: (b, 0, 0)),
        ),
        compiler_params=pltpu.CompilerParams(
            dimension_semantics=("parallel",),
            vmem_limit_bytes=vmem_limit,
        ),
        cost_estimate=cost,
    )(x, w1, w2)

    return out.reshape(B, C, H, W)


def reference_se_block(x_nchw, w1, w2):
    """Plain-JAX reference matching the PyTorch forward."""
    y = jnp.mean(x_nchw, axis=(2, 3))            # (B, C)
    h = jnp.maximum(y @ w1, 0.0)                 # (B, Cr)
    s = jax.nn.sigmoid(h @ w2)                   # (B, C)
    return x_nchw * s[:, :, None, None]


if __name__ == "__main__":
    key = jax.random.PRNGKey(0)
    kx, k1, k2, kx2 = jax.random.split(key, 4)

    # Shapes consistent with SEBlock: channel divisible by reduction.
    C, reduction = 64, 16
    Cr = C // reduction
    # Weights stored pre-transposed: w1: (C, Cr) so y @ w1 == y @ W_fc1.T ; w2: (Cr, C).
    w1 = jax.random.normal(k1, (C, Cr), dtype=jnp.float32) * (1.0 / (C ** 0.5))
    w2 = jax.random.normal(k2, (Cr, C), dtype=jnp.float32) * (1.0 / (Cr ** 0.5))

    # --- Main single-pass path (HW = 196, deliberately NOT a multiple of 128) ---
    B, H, W = 4, 14, 14
    x = jax.random.normal(kx, (B, C, H, W), dtype=jnp.float32)
    out = jax.block_until_ready(se_block(x, w1, w2))
    ref = jax.block_until_ready(reference_se_block(x, w1, w2))
    assert out.shape == (B, C, H, W)
    assert jnp.allclose(out, ref, atol=1e-5, rtol=1e-5), "main-path mismatch vs reference"

    # --- Spatial-split fallback path (forced with a tiny per-block budget) ---
    B2, H2, W2 = 2, 12, 12
    x2 = jax.random.normal(kx2, (B2, C, H2, W2), dtype=jnp.float32)
    out2 = jax.block_until_ready(se_block(x2, w1, w2, block_budget_bytes=16 << 10))
    ref2 = jax.block_until_ready(reference_se_block(x2, w1, w2))
    assert out2.shape == (B2, C, H2, W2)
    assert jnp.allclose(out2, ref2, atol=1e-5, rtol=1e-5), "fallback-path mismatch vs reference"

    print("KERNEL_OK")
</pallas_src>

<mosaic_0001>
module attributes {stable_mosaic.version = 11 : i64} {
  func.func @se_block_kernel(%arg0: i32, %arg1: memref<1x64x196xf32, #tpu.memory_space<vmem>>, %arg2: memref<64x4xf32, #tpu.memory_space<vmem>>, %arg3: memref<4x64xf32, #tpu.memory_space<vmem>>, %arg4: memref<1x64x196xf32, #tpu.memory_space<vmem>>) attributes {dimension_semantics = [#tpu.dimension_semantics<parallel>], iteration_bounds = array<i64: 4>, scalar_prefetch = 0 : i64, scratch_operands = 0 : i64, tpu.core_type = #tpu.core_type<tc>, window_params = [{transform_indices = @transform_0, window_bounds = array<i64: 1, 64, 196>}, {pipeline_mode = #tpu.pipeline_mode<synchronous>, transform_indices = @transform_1, window_bounds = array<i64: 64, 4>}, {pipeline_mode = #tpu.pipeline_mode<synchronous>, transform_indices = @transform_2, window_bounds = array<i64: 4, 64>}, {transform_indices = @transform_3, window_bounds = array<i64: 1, 64, 196>}]} {
    %c0 = arith.constant 0 : index
    %c0_0 = arith.constant 0 : index
    %c0_1 = arith.constant 0 : index
    %0 = vector.load %arg1[%c0, %c0_0, %c0_1] : memref<1x64x196xf32, #tpu.memory_space<vmem>>, vector<1x64x196xf32>
    %cst = arith.constant dense<0.000000e+00> : vector<1x64xf32>
    %1 = vector.multi_reduction <add>, %0, %cst [2] : vector<1x64x196xf32> to vector<1x64xf32>
    %cst_2 = arith.constant 0.00510204071 : f32
    %2 = vector.broadcast %cst_2 : f32 to vector<1x64xf32>
    %3 = arith.mulf %1, %2 : vector<1x64xf32>
    %c0_3 = arith.constant 0 : index
    %c0_4 = arith.constant 0 : index
    %4 = vector.load %arg2[%c0_3, %c0_4] : memref<64x4xf32, #tpu.memory_space<vmem>>, vector<64x4xf32>
    %cst_5 = arith.constant dense<0.000000e+00> : vector<1x4xf32>
    %5 = tpu.matmul %3, %4, %cst_5 {dimension_numbers = #tpu.dot_dimension_numbers<[1], [0], [0], [1], [0, 0, 1, 1], [], []>} : vector<1x64xf32>, vector<64x4xf32>, vector<1x4xf32> -> vector<1x4xf32>
    %cst_6 = arith.constant 0.000000e+00 : f32
    %6 = vector.broadcast %cst_6 : f32 to vector<1x4xf32>
    %7 = arith.maximumf %5, %6 : vector<1x4xf32>
    %c0_7 = arith.constant 0 : index
    %c0_8 = arith.constant 0 : index
    %8 = vector.load %arg3[%c0_7, %c0_8] : memref<4x64xf32, #tpu.memory_space<vmem>>, vector<4x64xf32>
    %cst_9 = arith.constant dense<0.000000e+00> : vector<1x64xf32>
    %9 = tpu.matmul %7, %8, %cst_9 {dimension_numbers = #tpu.dot_dimension_numbers<[1], [0], [0], [1], [0, 0, 1, 1], [], []>} : vector<1x4xf32>, vector<4x64xf32>, vector<1x64xf32> -> vector<1x64xf32>
    %10 = arith.negf %9 : vector<1x64xf32>
    %11 = math.exp %10 : vector<1x64xf32>
    %cst_10 = arith.constant 1.000000e+00 : f32
    %12 = vector.broadcast %cst_10 : f32 to vector<1x64xf32>
    %13 = arith.addf %12, %11 : vector<1x64xf32>
    %14 = arith.divf %12, %13 : vector<1x64xf32>
    %c0_11 = arith.constant 0 : index
    %c0_12 = arith.constant 0 : index
    %c0_13 = arith.constant 0 : index
    %15 = vector.load %arg1[%c0_11, %c0_12, %c0_13] : memref<1x64x196xf32, #tpu.memory_space<vmem>>, vector<1x64x196xf32>
    %16 = vector.shape_cast %14 : vector<1x64xf32> to vector<1x64x1xf32>
    %17 = vector.broadcast %16 : vector<1x64x1xf32> to vector<1x64x196xf32>
    %18 = arith.mulf %15, %17 : vector<1x64x196xf32>
    %c0_14 = arith.constant 0 : index
    %c0_15 = arith.constant 0 : index
    %c0_16 = arith.constant 0 : index
    %19 = vector.load %arg4[%c0_14, %c0_15, %c0_16] : memref<1x64x196xf32, #tpu.memory_space<vmem>>, vector<1x64x196xf32>
    tpu.vector_store %arg4[%c0_14, %c0_15, %c0_16], %18 {strides = array<i32>} : memref<1x64x196xf32, #tpu.memory_space<vmem>>, vector<1x64x196xf32>,
    return
  }
  func.func @transform_0(%arg0: i32) -> (i32, i32, i32) {
    %c0_i32 = arith.constant 0 : i32
    %c0_i32_0 = arith.constant 0 : i32
    %c0_i32_1 = arith.constant 0 : i32
    return %arg0, %c0_i32, %c0_i32_0 : i32, i32, i32
  }
  func.func @transform_1(%arg0: i32) -> (i32, i32) {
    %c0_i32 = arith.constant 0 : i32
    %c0_i32_0 = arith.constant 0 : i32
    %c0_i32_1 = arith.constant 0 : i32
    return %c0_i32, %c0_i32_0 : i32, i32
  }
  func.func @transform_2(%arg0: i32) -> (i32, i32) {
    %c0_i32 = arith.constant 0 : i32
    %c0_i32_0 = arith.constant 0 : i32
    %c0_i32_1 = arith.constant 0 : i32
    return %c0_i32, %c0_i32_0 : i32, i32
  }
  func.func @transform_3(%arg0: i32) -> (i32, i32, i32) {
    %c0_i32 = arith.constant 0 : i32
    %c0_i32_0 = arith.constant 0 : i32
    %c0_i32_1 = arith.constant 0 : i32
    return %arg0, %c0_i32, %c0_i32_0 : i32, i32, i32
  }
}

</mosaic_0001>

<llo_original>
// kernel: tpu_custom_call.1
$region0: #{tpu_custom_call.1}
  #allocation0 [shape = 'u32[]', space=smem, size = 0x4, offset = 0x4, fixed_abs, tag = 'smem constant byte address 0x4 - core index']
  #allocation1 [shape = 'u32[144,128]{1,0:T(1,128)}', space=vmem, size = 0x12000, scoped, tag = 'internal scratch']
  %s0 = inlined_call_operand.hbm [shape: f32[4,64,196], index: 0, kind: input, shape index: {}]
  %s1 = inlined_call_operand.vmem [shape: f32[64,4], index: 1, kind: input, shape index: {}]
  %s2 = inlined_call_operand.vmem [shape: f32[4,64], index: 2, kind: input, shape index: {}]
  %s3 = inlined_call_operand.hbm [shape: f32[4,64,196], index: 3, kind: output, shape index: {}]
  %s4 = sld [smem:[#allocation0]]
  $region49: #{tpu_custom_call.1} parent=0
    _
  %s6 = ssub.s32 1, %s4
  %s7 = scalar_select 0, %s6, %s4
  $region1: #{tpu_custom_call.1} parent=0
    #allocation2 [shape = 'u8[131072]{0}', space=vmem, size = 0x20000, scoped, tag = 'input window, operand 0']
    #allocation3 [shape = 's32[2]{0}', space=sflag, size = 0x8, scoped, tag = 'scoped memory for tpu_custom_call.1']
    #allocation4 [shape = 's32[2]{0}', space=sflag, size = 0x8, scoped, tag = 'scoped memory for tpu_custom_call.1']
    #allocation5 [shape = 'u8[131072]{0}', space=vmem, size = 0x20000, scoped, tag = 'output window, operand 0']
    %8 = vsyncpa [#allocation3], 0
    %s9 = scalar_lea.sflag [#allocation3], 1
    %10 = vsyncpa %s9, 0
    %11 = vsyncpa [#allocation4], 0
    %s12 = scalar_lea.sflag [#allocation4], 1
    %13 = vsyncpa %s12, 0
    loop: start=0, step=1, limit=6
    $region2: #{tpu_custom_call.1} parent=1 // loop_pre_header
      _
    $region3: #{tpu_custom_call.1} parent=1 // loop_header
      %s15 = sphi 0, %s19
      %p16 = scmp.ge.s32.totalorder %s15, 6
      %s25 = sphi 0, %s27
      %s28 = sphi 0, %s25
      %s29 = sphi 0, %s28
      %s45 = sphi 0, %s29
      %s49 = sphi 0, %s49
      %s51 = sphi 0, %s49
      %s52 = sphi 0, %s51
      %s66 = sphi 0, %s52
      %s70 = sphi 0, %s70
      %s72 = sphi 0, %s70
      %s73 = sphi 0, %s72
      %s87 = sphi 0, %s73
      %s93 = sphi 0, %s95
      %s96 = sphi 0, %s93
      %s97 = sphi 0, %s96
      %s113 = sphi 0, %s97
    $region4: #{tpu_custom_call.1} parent=1 // loop_header_branch
      %18 = sbr.rel (%p16) target = $region8
    $region5: #{tpu_custom_call.1} parent=1 // loop_body
      %s20 = ssub.s32 %s15, 1
      %s21 = ssub.s32 %s15, 2
      %s22 = sadd.s32 %s15, 1
      %s23 = ssub.s32 %s15, %s22
      %p24 = scmp.eq.s32.totalorder %s23, 0
      %s26 = sadd.s32 %s25, 1
      %s27 = scalar_select %p24, %s25, %s26
      %p30 = pneg %p24
      %p31 = scmp.eq.s32.totalorder %s15, 3
      %p32 = por %p30, %p31
      %p33 = scmp.ne.s32.totalorder %s25, %s28
      %p34 = scmp.eq.s32.totalorder %s15, 0
      %p35 = por %p33, %p34
      %p36 = scmp.ne.s32.totalorder %s25, %s28
      %p37 = scmp.eq.s32.totalorder %s20, 3
      %p38 = por %p36, %p37
      %p39 = scmp.ne.s32.totalorder %s28, %s29
      %p40 = scmp.eq.s32.totalorder %s20, 0
      %p41 = por %p39, %p40
      %p42 = scmp.ne.s32.totalorder %s28, %s29
      %p43 = scmp.eq.s32.totalorder %s21, 3
      %p44 = por %p42, %p43
      %p46 = scmp.ne.s32.totalorder %s29, %s45
      %p47 = scmp.eq.s32.totalorder %s21, 0
      %p48 = por %p46, %p47
      %s50 = sadd.s32 %s49, 1
      %p53 = scmp.eq.s32.totalorder %s15, 3
      %p54 = scmp.ne.s32.totalorder %s49, %s51
      %p55 = scmp.eq.s32.totalorder %s15, 0
      %p56 = por %p54, %p55
      %p57 = scmp.ne.s32.totalorder %s49, %s51
      %p58 = scmp.eq.s32.totalorder %s20, 3
      %p59 = por %p57, %p58
      %p60 = scmp.ne.s32.totalorder %s51, %s52
      %p61 = scmp.eq.s32.totalorder %s20, 0
      %p62 = por %p60, %p61
      %p63 = scmp.ne.s32.totalorder %s51, %s52
      %p64 = scmp.eq.s32.totalorder %s21, 3
      %p65 = por %p63, %p64
      %p67 = scmp.ne.s32.totalorder %s52, %s66
      %p68 = scmp.eq.s32.totalorder %s21, 0
      %p69 = por %p67, %p68
      %s71 = sadd.s32 %s70, 1
      %p74 = scmp.eq.s32.totalorder %s15, 3
      %p75 = scmp.ne.s32.totalorder %s70, %s72
      %p76 = scmp.eq.s32.totalorder %s15, 0
      %p77 = por %p75, %p76
      %p78 = scmp.ne.s32.totalorder %s70, %s72
      %p79 = scmp.eq.s32.totalorder %s20, 3
      %p80 = por %p78, %p79
      %p81 = scmp.ne.s32.totalorder %s72, %s73
      %p82 = scmp.eq.s32.totalorder %s20, 0
      %p83 = por %p81, %p82
      %p84 = scmp.ne.s32.totalorder %s72, %s73
      %p85 = scmp.eq.s32.totalorder %s21, 3
      %p86 = por %p84, %p85
      %p88 = scmp.ne.s32.totalorder %s73, %s87
      %p89 = scmp.eq.s32.totalorder %s21, 0
      %p90 = por %p88, %p89
      %s91 = ssub.s32 %s15, %s22
      %p92 = scmp.eq.s32.totalorder %s91, 0
      %s94 = sadd.s32 %s93, 1
      %s95 = scalar_select %p92, %s93, %s94
      %p98 = pneg %p92
      %p99 = scmp.eq.s32.totalorder %s15, 3
      %p100 = por %p98, %p99
      %p101 = scmp.ne.s32.totalorder %s93, %s96
      %p102 = scmp.eq.s32.totalorder %s15, 0
      %p103 = por %p101, %p102
      %p104 = scmp.ne.s32.totalorder %s93, %s96
      %p105 = scmp.eq.s32.totalorder %s20, 3
      %p106 = por %p104, %p105
      %p107 = scmp.ne.s32.totalorder %s96, %s97
      %p108 = scmp.eq.s32.totalorder %s20, 0
      %p109 = por %p107, %p108
      %p110 = scmp.ne.s32.totalorder %s96, %s97
      %p111 = scmp.eq.s32.totalorder %s21, 3
      %p112 = por %p110, %p111
      %p114 = scmp.ne.s32.totalorder %s97, %s113
      %p115 = scmp.eq.s32.totalorder %s21, 0
      %p116 = por %p114, %p115
      %p117 = scmp.le.s32.totalorder 1, %s15
      %p118 = scmp.lt.s32.totalorder %s15, 5
      %p119 = pnand %p117, %p118
      %p120 = pneg %p119
      // Predicated region
      $region9: #{tpu_custom_call.1} parent=5 // pred_check
        _
      $region10: #{tpu_custom_call.1} parent=5 // pred_check_branch
        %122 = sbr.rel (%p119) target = $region12
      $region11: #{tpu_custom_call.1} parent=5 // pred_region
        %s123 = ssub.s32 %s15, 1
        // Predicated region
        $region13: #{tpu_custom_call.1} parent=11 // pred_check
          %p124 = pneg %p62
        $region14: #{tpu_custom_call.1} parent=11 // pred_check_branch
          %126 = sbr.rel (%p124) target = $region16
        $region15: #{tpu_custom_call.1} parent=11 // pred_region
          _
        $region16: #{tpu_custom_call.1} parent=11 // pred_fallthru
          _
        // Predicated region
        $region17: #{tpu_custom_call.1} parent=11 // pred_check
          %p127 = pneg %p83
        $region18: #{tpu_custom_call.1} parent=11 // pred_check_branch
          %129 = sbr.rel (%p127) target = $region20
        $region19: #{tpu_custom_call.1} parent=11 // pred_region
          _
        $region20: #{tpu_custom_call.1} parent=11 // pred_fallthru
          _
      $region12: #{tpu_custom_call.1} parent=5 // pred_fallthru
        _
      %p130 = scmp.lt.s32.totalorder %s15, 4
      // Predicated region
      $region21: #{tpu_custom_call.1} parent=5 // pred_check
        %p131 = pneg %p130
      $region22: #{tpu_custom_call.1} parent=5 // pred_check_branch
        %133 = sbr.rel (%p131) target = $region24
      $region23: #{tpu_custom_call.1} parent=5 // pred_region
        // Predicated region
        $region25: #{tpu_custom_call.1} parent=23 // pred_check
          %p134 = pneg %p35
        $region26: #{tpu_custom_call.1} parent=23 // pred_check_branch
          %136 = sbr.rel (%p134) target = $region28
        $region27: #{tpu_custom_call.1} parent=23 // pred_region
          %s137 = sand.u32 %s25, 1
          %s138 = scalar_lea.sflag [#allocation3], %s137
          %s139 = sand.u32 %s25, 1
          %s140 = smul.addr %s139, 128
          %s141 = scalar_lea.vmem [#allocation2], %s140
          %s143 = ssub.s32 2048, 2048
          %144 = vsyncadd %s138, %s143
          %s145 = smul.addr %s15, 16
          %s146 = smul.addr %s145, 128
          %s147 = scalar_lea.hbm %s0, %s146
          %s148 = sshll.u32 %s141, 4
          %s149 = int_to_ptr.vmem [resolvable:$true] %s148
          %154 = dma.hbm_to_vmem [thread:$0]  %s147, 2048, %s149, %s138, 256, 256, 16
        $region28: #{tpu_custom_call.1} parent=23 // pred_fallthru
          _
      $region24: #{tpu_custom_call.1} parent=5 // pred_fallthru
        _
      %p155 = scmp.le.s32.totalorder 1, %s15
      %p156 = scmp.lt.s32.totalorder %s15, 5
      %p157 = pnand %p155, %p156
      %p158 = pneg %p157
      // Predicated region
      $region29: #{tpu_custom_call.1} parent=5 // pred_check
        _
      $region30: #{tpu_custom_call.1} parent=5 // pred_check_branch
        %160 = sbr.rel (%p157) target = $region32
      $region31: #{tpu_custom_call.1} parent=5 // pred_region
        %s161 = ssub.s32 %s15, 1
        %s162 = sand.u32 %s28, 1
        %s163 = scalar_lea.sflag [#allocation3], %s162
        %s164 = sand.u32 %s28, 1
        %s165 = smul.addr %s164, 128
        %s166 = scalar_lea.vmem [#allocation2], %s165
        // Predicated region
        $region33: #{tpu_custom_call.1} parent=31 // pred_check
          %p167 = pneg %p41
        $region34: #{tpu_custom_call.1} parent=31 // pred_check_branch
          %169 = sbr.rel (%p167) target = $region36
        $region35: #{tpu_custom_call.1} parent=31 // pred_region
          %170 = dma.done %s163, 2048
        $region36: #{tpu_custom_call.1} parent=31 // pred_fallthru
          _
        %s171 = sand.u32 %s28, 1
        %s172 = scalar_lea.sflag [#allocation3], %s171
        %s173 = sand.u32 %s28, 1
        %s174 = smul.addr %s173, 128
        %s175 = scalar_lea.vmem [#allocation2], %s174
        %p176 = pneg %p41
        %p177 = pneg %p38
        %p178 = pneg %p62
        %p179 = pneg %p59
        %p180 = pneg %p83
        %p181 = pneg %p80
        %p182 = pneg %p109
        %p183 = pneg %p106
        %s184 = sand.u32 %s96, 1
        %s185 = scalar_lea.sflag [#allocation4], %s184
        %s186 = sand.u32 %s96, 1
        %s187 = smul.addr %s186, 128
        %s188 = scalar_lea.vmem [#allocation5], %s187
        %v189 = vld [vmem:[%s166] sm:$0xff]
        %v190 = vld [vmem:[%s166 + $0x8] sm:$0xff]
        %v191 = vld [vmem:[%s166 + $0x10] sm:$0xff]
        %v192 = vld [vmem:[%s166 + $0x18] sm:$0xff]
        %v193 = vld [vmem:[%s166 + $0x20] sm:$0xff]
        %v194 = vld [vmem:[%s166 + $0x28] sm:$0xff]
        %v195 = vld [vmem:[%s166 + $0x30] sm:$0xff]
        %v196 = vld [vmem:[%s166 + $0x38] sm:$0xff]
        %v197 = vld [vmem:[%s166 + $0x40] sm:$0xff]
        %v198 = vld [vmem:[%s166 + $0x48] sm:$0xff]
        %v199 = vld [vmem:[%s166 + $0x50] sm:$0xff]
        %v200 = vld [vmem:[%s166 + $0x58] sm:$0xff]
        %v201 = vld [vmem:[%s166 + $0x60] sm:$0xff]
        %v202 = vld [vmem:[%s166 + $0x68] sm:$0xff]
        %v203 = vld [vmem:[%s166 + $0x70] sm:$0xff]
        %v204 = vld [vmem:[%s166 + $0x78] sm:$0xff]
        %vm205 = vcmask 556032
        %v206 = vsel %vm205, %v190, 0.0
        %v207 = vadd.f32 %v189, %v206
        %208 = vadd.xlane.f32.xlu0 %v207
        %v209 = vpop.xlane.xlu0 %208
        %v210 = vsel %vm205, %v192, 0.0
        %v211 = vadd.f32 %v191, %v210
        %212 = vadd.xlane.f32.xlu0 %v211
        %v213 = vpop.xlane.xlu0 %212
        %v214 = vsel %vm205, %v194, 0.0
        %v215 = vadd.f32 %v193, %v214
        %216 = vadd.xlane.f32.xlu0 %v215
        %v217 = vpop.xlane.xlu0 %216
        %v218 = vsel %vm205, %v196, 0.0
        %v219 = vadd.f32 %v195, %v218
        %220 = vadd.xlane.f32.xlu0 %v219
        %v221 = vpop.xlane.xlu0 %220
        %v222 = vsel %vm205, %v198, 0.0
        %v223 = vadd.f32 %v197, %v222
        %224 = vadd.xlane.f32.xlu0 %v223
        %v225 = vpop.xlane.xlu0 %224
        %v226 = vsel %vm205, %v200, 0.0
        %v227 = vadd.f32 %v199, %v226
        %228 = vadd.xlane.f32.xlu0 %v227
        %v229 = vpop.xlane.xlu0 %228
        %v230 = vsel %vm205, %v202, 0.0
        %v231 = vadd.f32 %v201, %v230
        %232 = vadd.xlane.f32.xlu0 %v231
        %v233 = vpop.xlane.xlu0 %232
        %v234 = vsel %vm205, %v204, 0.0
        %v235 = vadd.f32 %v203, %v234
        %236 = vadd.xlane.f32.xlu0 %v235
        %v237 = vpop.xlane.xlu0 %236
        %v238 = vmul.f32 %v209, 0.0051020407
        %v239 = vmul.f32 %v213, 0.0051020407
        %v240 = vmul.f32 %v217, 0.0051020407
        %v241 = vmul.f32 %v221, 0.0051020407
        %v242 = vmul.f32 %v225, 0.0051020407
        %v243 = vmul.f32 %v229, 0.0051020407
        %v244 = vmul.f32 %v233, 0.0051020407
        %v245 = vmul.f32 %v237, 0.0051020407
        %v246 = vld [vmem:[%s1] sm:$0xff]
        %v247 = vld [vmem:[%s1 + $0x8] sm:$0xff]
        %v248 = vld [vmem:[%s1 + $0x10] sm:$0xff]
        %v249 = vld [vmem:[%s1 + $0x18] sm:$0xff]
        %v250 = vld [vmem:[%s1 + $0x20] sm:$0xff]
        %v251 = vld [vmem:[%s1 + $0x28] sm:$0xff]
        %v252 = vld [vmem:[%s1 + $0x30] sm:$0xff]
        %v253 = vld [vmem:[%s1 + $0x38] sm:$0xff]
        %v262 = vlaneseq
        %v263 = vand.u32 %v262, 127
        %v264 = vlaneseq
        %v265 = vshrl.u32 %v264, 7
        %v266 = vsub.s32 %v263, %v265
        %v267 = vrot.slane %v238, %v266
        %v268 = vadd.s32 %v263, 4294967288
        %v269 = vlaneseq
        %v270 = vshrl.u32 %v269, 7
        %v271 = vsub.s32 %v268, %v270
        %v272 = vrot.slane %v239, %v271
        %vm273 = vcmask 130112
        %v274 = vsel %vm273, %v272, %v267
        %v275 = vadd.s32 %v263, 4294967280
        %v276 = vlaneseq
        %v277 = vshrl.u32 %v276, 7
        %v278 = vsub.s32 %v275, %v277
        %v279 = vrot.slane %v240, %v278
        %vm280 = vcmask 195712
        %v281 = vsel %vm280, %v279, %v274
        %v282 = vadd.s32 %v263, 4294967272
        %v283 = vlaneseq
        %v284 = vshrl.u32 %v283, 7
        %v285 = vsub.s32 %v282, %v284
        %v286 = vrot.slane %v241, %v285
        %vm287 = vcmask 261312
        %v288 = vsel %vm287, %v286, %v281
        %v289 = vadd.s32 %v263, 4294967264
        %v290 = vlaneseq
        %v291 = vshrl.u32 %v290, 7
        %v292 = vsub.s32 %v289, %v291
        %v293 = vrot.slane %v242, %v292
        %vm294 = vcmask 326912
        %v295 = vsel %vm294, %v293, %v288
        %v296 = vadd.s32 %v263, 4294967256
        %v297 = vlaneseq
        %v298 = vshrl.u32 %v297, 7
        %v299 = vsub.s32 %v296, %v298
        %v300 = vrot.slane %v243, %v299
        %vm301 = vcmask 392512
        %v302 = vsel %vm301, %v300, %v295
        %v303 = vadd.s32 %v263, 4294967248
        %v304 = vlaneseq
        %v305 = vshrl.u32 %v304, 7
        %v306 = vsub.s32 %v303, %v305
        %v307 = vrot.slane %v244, %v306
        %vm308 = vcmask 458112
        %v309 = vsel %vm308, %v307, %v302
        %v310 = vadd.s32 %v263, 4294967240
        %v311 = vlaneseq
        %v312 = vshrl.u32 %v311, 7
        %v313 = vsub.s32 %v310, %v312
        %v314 = vrot.slane %v245, %v313
        %vm315 = vcmask 523712
        %v316 = vsel %vm315, %v314, %v309
        %vm317 = vcmask 523264
        %v318 = vsel %vm317, %v316, 0
        %320 = vmatprep.subr.mxu0 0.0
        %321 = vmatpush1.msra.mxu0 0.0
        %322 = vmatprep.subr.mxu0 0.0
        %323 = vmatpush1.msra.mxu0 0.0
        %324 = vmatprep.subr.mxu0 0.0
        %325 = vmatpush1.msra.mxu0 0.0
        %326 = vmatprep.subr.mxu0 0.0
        %327 = vmatpush1.msra.mxu0 0.0
        %328 = vmatprep.subr.mxu0 0.0
        %329 = vmatpush1.msra.mxu0 0.0
        %330 = vmatprep.subr.mxu0 0.0
        %331 = vmatpush1.msra.mxu0 0.0
        %332 = vmatprep.subr.mxu0 0.0
        %333 = vmatpush1.msra.mxu0 0.0
        %334 = vmatprep.subr.mxu0 0.0
        %335 = vmatpush1.msra.mxu0 0.0
        %336 = vmatprep.subr.mxu0 0.0
        %337 = vmatpush1.msra.mxu0 %v253
        %338 = vmatprep.subr.mxu0 0.0
        %339 = vmatpush1.msra.mxu0 %v252
        %340 = vmatprep.subr.mxu0 0.0
        %341 = vmatpush1.msra.mxu0 %v251
        %342 = vmatprep.subr.mxu0 0.0
        %343 = vmatpush1.msra.mxu0 %v250
        %344 = vmatprep.subr.mxu0 0.0
        %345 = vmatpush1.msra.mxu0 %v249
        %346 = vmatprep.subr.mxu0 0.0
        %347 = vmatpush1.msra.mxu0 %v248
        %348 = vmatprep.subr.mxu0 0.0
        %349 = vmatpush1.msra.mxu0 %v247
        %350 = vmatprep.subr.mxu0 0.0
        %351 = vmatpush1.msra.mxu0 %v246
        %352 = vmatprep.subr.mxu0 0.0
        %353 = vmatpush2.msra.mxu0 0.0
        %354 = vmatprep.subr.mxu0 0.0
        %355 = vmatpush2.msra.mxu0 0.0
        %356 = vmatprep.subr.mxu0 0.0
        %357 = vmatpush2.msra.mxu0 0.0
        %358 = vmatprep.subr.mxu0 0.0
        %359 = vmatpush2.msra.mxu0 0.0
        %360 = vmatprep.subr.mxu0 0.0
        %361 = vmatpush2.msra.mxu0 0.0
        %362 = vmatprep.subr.mxu0 0.0
        %363 = vmatpush2.msra.mxu0 0.0
        %364 = vmatprep.subr.mxu0 0.0
        %365 = vmatpush2.msra.mxu0 0.0
        %366 = vmatprep.subr.mxu0 0.0
        %367 = vmatpush2.msra.mxu0 0.0
        %368 = vmatprep.subr.mxu0 0.0
        %369 = vmatpush2.msra.mxu0 0.0
        %370 = vmatprep.subr.mxu0 0.0
        %371 = vmatpush2.msra.mxu0 0.0
        %372 = vmatprep.subr.mxu0 0.0
        %373 = vmatpush2.msra.mxu0 0.0
        %374 = vmatprep.subr.mxu0 0.0
        %375 = vmatpush2.msra.mxu0 0.0
        %376 = vmatprep.subr.mxu0 0.0
        %377 = vmatpush2.msra.mxu0 0.0
        %378 = vmatprep.subr.mxu0 0.0
        %379 = vmatpush2.msra.mxu0 0.0
        %380 = vmatprep.subr.mxu0 0.0
        %381 = vmatpush2.msra.mxu0 0.0
        %382 = vmatprep.subr.mxu0 0.0
        %383 = vmatpush2.msra.mxu0 0.0
        %384 = vmatprep.mubr.f32.mxu0 0.0
        %385 = vmatmul.mubr.f32.gmra.mxu0 %v318
        %v386 = vpop.f32.mrf.mxu0
        %v387 = vadd.f32 0.0, %v386
        %v388 = vpop.f32.mrf.mxu0
        %389 = vdwg.mxu0
        %v390 = vmax.f32 %v387, 0.0
        %v391 = vld [vmem:[%s2] sm:$0xf]
        %vm392 = vcmask 31744
        %v394 = vsel %vm392, %v390, 0
        %vm396 = vcmask 1043456
        %v398 = vsel %vm396, %v391, 0
        %400 = vmatprep.subr.mxu0 0.0
        %401 = vmatpush1.msra.mxu0 0.0
        %402 = vmatprep.subr.mxu0 0.0
        %403 = vmatpush1.msra.mxu0 0.0
        %404 = vmatprep.subr.mxu0 0.0
        %405 = vmatpush1.msra.mxu0 0.0
        %406 = vmatprep.subr.mxu0 0.0
        %407 = vmatpush1.msra.mxu0 0.0
        %408 = vmatprep.subr.mxu0 0.0
        %409 = vmatpush1.msra.mxu0 0.0
        %410 = vmatprep.subr.mxu0 0.0
        %411 = vmatpush1.msra.mxu0 0.0
        %412 = vmatprep.subr.mxu0 0.0
        %413 = vmatpush1.msra.mxu0 0.0
        %414 = vmatprep.subr.mxu0 0.0
        %415 = vmatpush1.msra.mxu0 0.0
        %416 = vmatprep.subr.mxu0 0.0
        %417 = vmatpush1.msra.mxu0 0.0
        %418 = vmatprep.subr.mxu0 0.0
        %419 = vmatpush1.msra.mxu0 0.0
        %420 = vmatprep.subr.mxu0 0.0
        %421 = vmatpush1.msra.mxu0 0.0
        %422 = vmatprep.subr.mxu0 0.0
        %423 = vmatpush1.msra.mxu0 0.0
        %424 = vmatprep.subr.mxu0 0.0
        %425 = vmatpush1.msra.mxu0 0.0
        %426 = vmatprep.subr.mxu0 0.0
        %427 = vmatpush1.msra.mxu0 0.0
        %428 = vmatprep.subr.mxu0 0.0
        %429 = vmatpush1.msra.mxu0 0.0
        %430 = vmatprep.subr.mxu0 0.0
        %431 = vmatpush1.msra.mxu0 %v398
        %432 = vmatprep.subr.mxu0 0.0
        %433 = vmatpush2.msra.mxu0 0.0
        %434 = vmatprep.subr.mxu0 0.0
        %435 = vmatpush2.msra.mxu0 0.0
        %436 = vmatprep.subr.mxu0 0.0
        %437 = vmatpush2.msra.mxu0 0.0
        %438 = vmatprep.subr.mxu0 0.0
        %439 = vmatpush2.msra.mxu0 0.0
        %440 = vmatprep.subr.mxu0 0.0
        %441 = vmatpush2.msra.mxu0 0.0
        %442 = vmatprep.subr.mxu0 0.0
        %443 = vmatpush2.msra.mxu0 0.0
        %444 = vmatprep.subr.mxu0 0.0
        %445 = vmatpush2.msra.mxu0 0.0
        %446 = vmatprep.subr.mxu0 0.0
        %447 = vmatpush2.msra.mxu0 0.0
        %448 = vmatprep.subr.mxu0 0.0
        %449 = vmatpush2.msra.mxu0 0.0
        %450 = vmatprep.subr.mxu0 0.0
        %451 = vmatpush2.msra.mxu0 0.0
        %452 = vmatprep.subr.mxu0 0.0
        %453 = vmatpush2.msra.mxu0 0.0
        %454 = vmatprep.subr.mxu0 0.0
        %455 = vmatpush2.msra.mxu0 0.0
        %456 = vmatprep.subr.mxu0 0.0
        %457 = vmatpush2.msra.mxu0 0.0
        %458 = vmatprep.subr.mxu0 0.0
        %459 = vmatpush2.msra.mxu0 0.0
        %460 = vmatprep.subr.mxu0 0.0
        %461 = vmatpush2.msra.mxu0 0.0
        %462 = vmatprep.subr.mxu0 0.0
        %463 = vmatpush2.msra.mxu0 0.0
        %464 = vmatprep.mubr.f32.mxu0 0.0
        %465 = vmatmul.mubr.f32.gmra.mxu0 %v394
        %v466 = vpop.f32.mrf.mxu0
        %v467 = vadd.f32 0.0, %v466
        %v468 = vpop.f32.mrf.mxu0
        %469 = vdwg.mxu0
        %v470 = vxor.u32 %v467, 2147483648
        %v471 = vmul.f32 %v470, 1.442695
        %v472 = vpow.pop %v471
        %v473 = vadd.f32 %v472, 1.0
        %v474 = vrcp.pop %v473
        %v475 = vmul.f32 1.0, %v474
        %v476 = vlaneseq
        %v477 = vshrl.u32 %v476, 7
        %v478 = vsub.s32 0, %v477
        %v479 = vrot.slane %v475, %v478
        %481 = vbcast.lane.b32.xlu0 %v479, 256
        %v482 = vpop.permute.xlu0 %481
        %s484 = sor.u32 256, 8
        %485 = vbcast.lane.b32.xlu0 %v479, %s484
        %v486 = vpop.permute.xlu0 %485
        %s488 = sor.u32 256, 16
        %489 = vbcast.lane.b32.xlu0 %v479, %s488
        %v490 = vpop.permute.xlu0 %489
        %s492 = sor.u32 256, 24
        %493 = vbcast.lane.b32.xlu0 %v479, %s492
        %v494 = vpop.permute.xlu0 %493
        %s496 = sor.u32 256, 32
        %497 = vbcast.lane.b32.xlu0 %v479, %s496
        %v498 = vpop.permute.xlu0 %497
        %s500 = sor.u32 256, 40
        %501 = vbcast.lane.b32.xlu0 %v479, %s500
        %v502 = vpop.permute.xlu0 %501
        %s504 = sor.u32 256, 48
        %505 = vbcast.lane.b32.xlu0 %v479, %s504
        %v506 = vpop.permute.xlu0 %505
        %s508 = sor.u32 256, 56
        %509 = vbcast.lane.b32.xlu0 %v479, %s508
        %v510 = vpop.permute.xlu0 %509
        %v511 = vmul.f32 %v189, %v482
        %v512 = vmul.f32 %v190, %v482
        %v513 = vmul.f32 %v191, %v486
        %v514 = vmul.f32 %v192, %v486
        %v515 = vmul.f32 %v193, %v490
        %v516 = vmul.f32 %v194, %v490
        %v517 = vmul.f32 %v195, %v494
        %v518 = vmul.f32 %v196, %v494
        %v519 = vmul.f32 %v197, %v498
        %v520 = vmul.f32 %v198, %v498
        %v521 = vmul.f32 %v199, %v502
        %v522 = vmul.f32 %v200, %v502
        %v523 = vmul.f32 %v201, %v506
        %v524 = vmul.f32 %v202, %v506
        %v525 = vmul.f32 %v203, %v510
        %v526 = vmul.f32 %v204, %v510
        %527 = vst [vmem:[%s188] sm:$0xff] %v511
        %528 = vst.msk [vmem:[%s188 + $0x8] sm:$0xff] %vm205, %v512
        %529 = vst [vmem:[%s188 + $0x10] sm:$0xff] %v513
        %530 = vst.msk [vmem:[%s188 + $0x18] sm:$0xff] %vm205, %v514
        %531 = vst [vmem:[%s188 + $0x20] sm:$0xff] %v515
        %532 = vst.msk [vmem:[%s188 + $0x28] sm:$0xff] %vm205, %v516
        %533 = vst [vmem:[%s188 + $0x30] sm:$0xff] %v517
        %534 = vst.msk [vmem:[%s188 + $0x38] sm:$0xff] %vm205, %v518
        %535 = vst [vmem:[%s188 + $0x40] sm:$0xff] %v519
        %536 = vst.msk [vmem:[%s188 + $0x48] sm:$0xff] %vm205, %v520
        %537 = vst [vmem:[%s188 + $0x50] sm:$0xff] %v521
        %538 = vst.msk [vmem:[%s188 + $0x58] sm:$0xff] %vm205, %v522
        %539 = vst [vmem:[%s188 + $0x60] sm:$0xff] %v523
        %540 = vst.msk [vmem:[%s188 + $0x68] sm:$0xff] %vm205, %v524
        %541 = vst [vmem:[%s188 + $0x70] sm:$0xff] %v525
        %542 = vst.msk [vmem:[%s188 + $0x78] sm:$0xff] %vm205, %v526
        %s543 = sand.u32 %s96, 1
        %s544 = scalar_lea.sflag [#allocation4], %s543
        %s545 = sand.u32 %s96, 1
        %s546 = smul.addr %s545, 128
        %s547 = scalar_lea.vmem [#allocation5], %s546
        // Predicated region
        $region37: #{tpu_custom_call.1} parent=31 // pred_check
          %p548 = pneg %p106
        $region38: #{tpu_custom_call.1} parent=31 // pred_check_branch
          %550 = sbr.rel (%p548) target = $region40
        $region39: #{tpu_custom_call.1} parent=31 // pred_region
          %s552 = ssub.s32 2048, 2048
          %553 = vsyncadd %s544, %s552
          %s554 = smul.addr %s20, 16
          %s555 = smul.addr %s554, 128
          %s556 = scalar_lea.hbm %s3, %s555
          %s557 = sshll.u32 %s547, 4
          %s558 = int_to_ptr.vmem [resolvable:$true] %s557
          %563 = dma.vmem_to_hbm [thread:$0]  %s558, 2048, %s556, %s544, 256, 256, 16
        $region40: #{tpu_custom_call.1} parent=31 // pred_fallthru
          _
      $region32: #{tpu_custom_call.1} parent=5 // pred_fallthru
        _
      %p564 = scmp.le.s32.totalorder 2, %s15
      // Predicated region
      $region41: #{tpu_custom_call.1} parent=5 // pred_check
        %p565 = pneg %p564
      $region42: #{tpu_custom_call.1} parent=5 // pred_check_branch
        %567 = sbr.rel (%p565) target = $region44
      $region43: #{tpu_custom_call.1} parent=5 // pred_region
        %s568 = ssub.s32 %s15, 2
        // Predicated region
        $region45: #{tpu_custom_call.1} parent=43 // pred_check
          %p569 = pneg %p112
        $region46: #{tpu_custom_call.1} parent=43 // pred_check_branch
          %571 = sbr.rel (%p569) target = $region48
        $region47: #{tpu_custom_call.1} parent=43 // pred_region
          %s572 = sand.u32 %s97, 1
          %s573 = scalar_lea.sflag [#allocation4], %s572
          %s574 = sand.u32 %s97, 1
          %s575 = smul.addr %s574, 128
          %s576 = scalar_lea.vmem [#allocation5], %s575
          %577 = dma.done %s573, 2048
        $region48: #{tpu_custom_call.1} parent=43 // pred_fallthru
          _
      $region44: #{tpu_custom_call.1} parent=5 // pred_fallthru
        _
    $region6: #{tpu_custom_call.1} parent=1 // loop_footer
      %s19 = sadd.s32 1, %s15
    $region7: #{tpu_custom_call.1} parent=1 // loop_footer_branch
      %14 = sbr.rel target = $region3
    $region8: #{tpu_custom_call.1} parent=1 // loop_exit
      _
    %578 = vsyncpa [#allocation3], 1
    %s579 = scalar_lea.sflag [#allocation3], 1
    %580 = vsyncpa %s579, 1
    %581 = vsyncpa [#allocation4], 1
    %s582 = scalar_lea.sflag [#allocation4], 1
    %583 = vsyncpa %s582, 1

</llo_original>
